<compile_context>
chip_gen: v7x
topology: tpu7x:2x2x1
jax: 0.10.0
libtpu: 0.0.40
codegen_flags: <defaults>
</compile_context>

<pallas_src>
import functools

import jax
import jax.numpy as jnp
from jax.experimental import pallas as pl
from jax.experimental.pallas import tpu as pltpu

_EPS = 1e-6  # torch.nn.functional.pairwise_distance default eps (added to the diff)

_MAX_TILE_B = 256
_MAX_TILE_D = 1024


def _contrastive_loss_kernel(o1_ref, o2_ref, lbl_ref, d2_ref, lh2_ref, acc_ref,
                             *, margin, d_total, tile_d, needs_d_mask):
  # o1_ref, o2_ref : (TILE_B, TILE_D) f32 VMEM   (streamed over the D grid axis)
  # lbl_ref        : (TILE_B, 1)      f32 VMEM
  # d2_ref         : (TILE_B, 1)      f32 VMEM   per-sample squared distance
  # lh2_ref        : (TILE_B, 1)      f32 VMEM   per-sample labels * hinge^2
  # acc_ref        : (TILE_B, 1)      f32 VMEM   scratch accumulator over D tiles
  k = pl.program_id(1)

  @pl.when(k == 0)
  def _():
    acc_ref[...] = jnp.zeros_like(acc_ref)

  diff = o1_ref[...] - o2_ref[...] + _EPS                      # (TILE_B, TILE_D)
  if needs_d_mask:
    # Last D tile is partial: zero out columns past the true feature dim.
    col = jax.lax.broadcasted_iota(jnp.int32, diff.shape, 1) + k * tile_d
    diff = jnp.where(col < d_total, diff, 0.0)
  acc_ref[...] += jnp.sum(diff * diff, axis=1, keepdims=True)  # (TILE_B, 1)

  @pl.when(k == pl.num_programs(1) - 1)
  def _():
    d2 = acc_ref[...]                                          # (TILE_B, 1)
    dist = jnp.sqrt(d2)                                        # L2 distance
    hinge = jnp.maximum(margin - dist, 0.0)
    d2_ref[...] = d2
    lh2_ref[...] = lbl_ref[...] * hinge * hinge


def contrastive_loss(output1, output2, labels, margin=2.0):
  """output1, output2: (B, D) float32; labels: (B,) float32 (0 similar, 1 dissimilar)."""
  output1 = jnp.asarray(output1, jnp.float32)
  output2 = jnp.asarray(output2, jnp.float32)
  labels = jnp.asarray(labels, jnp.float32)
  B, D = output1.shape

  # Tile sizes: full extent when small (always legal), aligned tiles when large.
  tile_b = B if B <= _MAX_TILE_B else _MAX_TILE_B          # multiple of 8 when tiled
  tile_d = D if D <= _MAX_TILE_D else _MAX_TILE_D          # multiple of 128 when tiled
  nb = pl.cdiv(B, tile_b)
  nd = pl.cdiv(D, tile_d)
  needs_d_mask = (D > tile_d) and (D % tile_d != 0)

  kernel = functools.partial(
      _contrastive_loss_kernel,
      margin=float(margin), d_total=D, tile_d=tile_d, needs_d_mask=needs_d_mask)

  d2, lh2 = pl.pallas_call(
      kernel,
      out_shape=(jax.ShapeDtypeStruct((B, 1), jnp.float32),
                 jax.ShapeDtypeStruct((B, 1), jnp.float32)),
      grid_spec=pltpu.PrefetchScalarGridSpec(
          num_scalar_prefetch=0,
          grid=(nb, nd),                        # D (reduction) last
          in_specs=[
              pl.BlockSpec((tile_b, tile_d), lambda i, k: (i, k)),
              pl.BlockSpec((tile_b, tile_d), lambda i, k: (i, k)),
              pl.BlockSpec((tile_b, 1), lambda i, k: (i, 0)),
          ],
          out_specs=(
              pl.BlockSpec((tile_b, 1), lambda i, k: (i, 0)),
              pl.BlockSpec((tile_b, 1), lambda i, k: (i, 0)),
          ),
          scratch_shapes=[pltpu.VMEM((tile_b, 1), jnp.float32)]),
      compiler_params=pltpu.CompilerParams(
          dimension_semantics=("parallel", "arbitrary")),
  )(output1, output2, labels.reshape(B, 1))

  # O(B) combine, reproducing torch's (B,B) broadcast + mean over B*B:
  #   sum(mat) = sum(1 - labels) * sum(d2) + B * sum(labels * hinge^2)
  total = (B - jnp.sum(labels)) * jnp.sum(d2) + B * jnp.sum(lh2)
  return total / (B * B)


def _reference_loss(output1, output2, labels, margin=2.0):
  """Plain-JAX replica of the PyTorch forward (same broadcasting quirk)."""
  dist = jnp.sqrt(jnp.sum((output1 - output2 + _EPS) ** 2, axis=1))      # (B,)
  mat = (1.0 - labels)[:, None] * (dist ** 2) \
        + labels * jnp.maximum(margin - dist, 0.0) ** 2                  # (B, B)
  return jnp.mean(mat)


if __name__ == "__main__":
  key = jax.random.PRNGKey(0)

  # Small case: single block, no tiling.
  k1, k2, k3 = jax.random.split(key, 3)
  B, D = 8, 32
  o1 = jax.random.normal(k1, (B, D), dtype=jnp.float32)
  o2 = jax.random.normal(k2, (B, D), dtype=jnp.float32)
  lbl = jax.random.bernoulli(k3, 0.5, (B,)).astype(jnp.float32)
  loss = contrastive_loss(o1, o2, lbl, margin=2.0)
  jax.block_until_ready(loss)
  ref = _reference_loss(o1, o2, lbl, margin=2.0)
  assert jnp.allclose(loss, ref, rtol=1e-5, atol=1e-5), (loss, ref)

  # Larger case: exercises B tiling (partial last B tile) and D tiling + mask.
  k4, k5, k6 = jax.random.split(jax.random.PRNGKey(1), 3)
  B2, D2 = 272, 1280
  o1b = jax.random.normal(k4, (B2, D2), dtype=jnp.float32)
  o2b = jax.random.normal(k5, (B2, D2), dtype=jnp.float32)
  lblb = jax.random.bernoulli(k6, 0.5, (B2,)).astype(jnp.float32)
  loss2 = contrastive_loss(o1b, o2b, lblb, margin=2.0)
  jax.block_until_ready(loss2)
  ref2 = _reference_loss(o1b, o2b, lblb, margin=2.0)
  assert jnp.allclose(loss2, ref2, rtol=1e-4, atol=1e-4), (loss2, ref2)

  print("KERNEL_OK")
</pallas_src>

<mosaic_0001>
module attributes {stable_mosaic.version = 11 : i64} {
  func.func @_contrastive_loss_kernel(%arg0: i32, %arg1: i32, %arg2: memref<8x32xf32, #tpu.memory_space<vmem>>, %arg3: memref<8x32xf32, #tpu.memory_space<vmem>>, %arg4: memref<8x1xf32, #tpu.memory_space<vmem>>, %arg5: memref<8x1xf32, #tpu.memory_space<vmem>>, %arg6: memref<8x1xf32, #tpu.memory_space<vmem>>, %arg7: memref<8x1xf32, #tpu.memory_space<vmem>>) attributes {dimension_semantics = [#tpu.dimension_semantics<parallel>, #tpu.dimension_semantics<arbitrary>], iteration_bounds = array<i64: 1, 1>, scalar_prefetch = 0 : i64, scratch_operands = 1 : i64, tpu.core_type = #tpu.core_type<tc>, window_params = [{transform_indices = @transform_0, window_bounds = array<i64: 8, 32>}, {transform_indices = @transform_1, window_bounds = array<i64: 8, 32>}, {transform_indices = @transform_2, window_bounds = array<i64: 8, 1>}, {transform_indices = @transform_3, window_bounds = array<i64: 8, 1>}, {transform_indices = @transform_4, window_bounds = array<i64: 8, 1>}]} {
    %c0_i32 = arith.constant 0 : i32
    %0 = arith.cmpi eq, %arg1, %c0_i32 : i32
    %1 = arith.extui %0 : i1 to i32
    %c0_i32_0 = arith.constant 0 : i32
    %2 = arith.cmpi ne, %1, %c0_i32_0 : i32
    scf.if %2 {
      %cst_11 = arith.constant 0.000000e+00 : f32
      %17 = vector.broadcast %cst_11 : f32 to vector<8x1xf32>
      %c0_12 = arith.constant 0 : index
      %c0_13 = arith.constant 0 : index
      %18 = vector.load %arg7[%c0_12, %c0_13] : memref<8x1xf32, #tpu.memory_space<vmem>>, vector<8x1xf32>
      tpu.vector_store %arg7[%c0_12, %c0_13], %17 {strides = array<i32>} : memref<8x1xf32, #tpu.memory_space<vmem>>, vector<8x1xf32>,
    } else {
    }
    %c0 = arith.constant 0 : index
    %c0_1 = arith.constant 0 : index
    %3 = vector.load %arg2[%c0, %c0_1] : memref<8x32xf32, #tpu.memory_space<vmem>>, vector<8x32xf32>
    %c0_2 = arith.constant 0 : index
    %c0_3 = arith.constant 0 : index
    %4 = vector.load %arg3[%c0_2, %c0_3] : memref<8x32xf32, #tpu.memory_space<vmem>>, vector<8x32xf32>
    %5 = arith.subf %3, %4 : vector<8x32xf32>
    %cst = arith.constant 9.99999997E-7 : f32
    %6 = vector.broadcast %cst : f32 to vector<8x32xf32>
    %7 = arith.addf %5, %6 : vector<8x32xf32>
    %c0_4 = arith.constant 0 : index
    %c0_5 = arith.constant 0 : index
    %8 = vector.load %arg7[%c0_4, %c0_5] : memref<8x1xf32, #tpu.memory_space<vmem>>, vector<8x1xf32>
    %9 = arith.mulf %7, %7 : vector<8x32xf32>
    %cst_6 = arith.constant dense<0.000000e+00> : vector<8xf32>
    %10 = vector.multi_reduction <add>, %9, %cst_6 [1] : vector<8x32xf32> to vector<8xf32>
    %11 = vector.shape_cast %10 : vector<8xf32> to vector<8x1xf32>
    %12 = arith.addf %8, %11 : vector<8x1xf32>
    %c0_7 = arith.constant 0 : index
    %c0_8 = arith.constant 0 : index
    %13 = vector.load %arg7[%c0_7, %c0_8] : memref<8x1xf32, #tpu.memory_space<vmem>>, vector<8x1xf32>
    tpu.vector_store %arg7[%c0_7, %c0_8], %12 {strides = array<i32>} : memref<8x1xf32, #tpu.memory_space<vmem>>, vector<8x1xf32>,
    %c0_i32_9 = arith.constant 0 : i32
    %14 = arith.cmpi eq, %arg1, %c0_i32_9 : i32
    %15 = arith.extui %14 : i1 to i32
    %c0_i32_10 = arith.constant 0 : i32
    %16 = arith.cmpi ne, %15, %c0_i32_10 : i32
    scf.if %16 {
      %c0_11 = arith.constant 0 : index
      %c0_12 = arith.constant 0 : index
      %17 = vector.load %arg7[%c0_11, %c0_12] : memref<8x1xf32, #tpu.memory_space<vmem>>, vector<8x1xf32>
      %18 = math.sqrt %17 : vector<8x1xf32>
      %cst_13 = arith.constant 2.000000e+00 : f32
      %19 = vector.broadcast %cst_13 : f32 to vector<8x1xf32>
      %20 = arith.subf %19, %18 : vector<8x1xf32>
      %cst_14 = arith.constant 0.000000e+00 : f32
      %21 = vector.broadcast %cst_14 : f32 to vector<8x1xf32>
      %22 = arith.maximumf %20, %21 : vector<8x1xf32>
      %c0_15 = arith.constant 0 : index
      %c0_16 = arith.constant 0 : index
      %23 = vector.load %arg5[%c0_15, %c0_16] : memref<8x1xf32, #tpu.memory_space<vmem>>, vector<8x1xf32>
      tpu.vector_store %arg5[%c0_15, %c0_16], %17 {strides = array<i32>} : memref<8x1xf32, #tpu.memory_space<vmem>>, vector<8x1xf32>,
      %c0_17 = arith.constant 0 : index
      %c0_18 = arith.constant 0 : index
      %24 = vector.load %arg4[%c0_17, %c0_18] : memref<8x1xf32, #tpu.memory_space<vmem>>, vector<8x1xf32>
      %25 = arith.mulf %24, %22 : vector<8x1xf32>
      %26 = arith.mulf %25, %22 : vector<8x1xf32>
      %c0_19 = arith.constant 0 : index
      %c0_20 = arith.constant 0 : index
      %27 = vector.load %arg6[%c0_19, %c0_20] : memref<8x1xf32, #tpu.memory_space<vmem>>, vector<8x1xf32>
      tpu.vector_store %arg6[%c0_19, %c0_20], %26 {strides = array<i32>} : memref<8x1xf32, #tpu.memory_space<vmem>>, vector<8x1xf32>,
    } else {
    }
    return
  }
  func.func @transform_0(%arg0: i32, %arg1: i32) -> (i32, i32) {
    %c0_i32 = arith.constant 0 : i32
    return %arg0, %arg1 : i32, i32
  }
  func.func @transform_1(%arg0: i32, %arg1: i32) -> (i32, i32) {
    %c0_i32 = arith.constant 0 : i32
    return %arg0, %arg1 : i32, i32
  }
  func.func @transform_2(%arg0: i32, %arg1: i32) -> (i32, i32) {
    %c0_i32 = arith.constant 0 : i32
    %c0_i32_0 = arith.constant 0 : i32
    return %arg0, %c0_i32 : i32, i32
  }
  func.func @transform_3(%arg0: i32, %arg1: i32) -> (i32, i32) {
    %c0_i32 = arith.constant 0 : i32
    %c0_i32_0 = arith.constant 0 : i32
    return %arg0, %c0_i32 : i32, i32
  }
  func.func @transform_4(%arg0: i32, %arg1: i32) -> (i32, i32) {
    %c0_i32 = arith.constant 0 : i32
    %c0_i32_0 = arith.constant 0 : i32
    return %arg0, %c0_i32 : i32, i32
  }
}

</mosaic_0001>

<llo_original>
// kernel: tpu_custom_call.1
$region0: #{tpu_custom_call.1}
  #allocation0 [shape = 'u32[]', space=smem, size = 0x4, offset = 0x4, fixed_abs, tag = 'smem constant byte address 0x4 - core index']
  #allocation1 [shape = 'u32[144,128]{1,0:T(1,128)}', space=vmem, size = 0x12000, scoped, tag = 'internal scratch']
  #allocation2 [shape = 'f32[8,1]{1,0:T(8,128)}', space=vmem, size = 0x1000, scoped, tag = 'scratch operand']
  %s0 = inlined_call_operand.vmem [shape: f32[8,32], index: 0, kind: input, shape index: {}]
  %s1 = inlined_call_operand.hbm [shape: f32[8,32], index: 1, kind: input, shape index: {}]
  %s2 = inlined_call_operand.vmem [shape: f32[8,1], index: 2, kind: input, shape index: {}]
  %s3 = inlined_call_operand.vmem [shape: f32[8,1], index: 3, kind: output, shape index: {0}]
  %s4 = inlined_call_operand.vmem [shape: f32[8,1], index: 4, kind: output, shape index: {1}]
  %5 = xla_tuple %s3, %s4
  %s6 = sld [smem:[#allocation0]]
  $region42: #{tpu_custom_call.1} parent=0
    _
  %s8 = ssub.s32 1, %s6
  %s9 = scalar_select 0, %s8, %s6
  $region1: #{tpu_custom_call.1} parent=0
    #allocation3 [shape = 'u8[4096]{0}', space=vmem, size = 0x1000, scoped, tag = 'input window, operand 1, single buffered']
    #allocation4 [shape = 's32[1]{0}', space=sflag, size = 0x4, scoped, tag = 'scoped memory for tpu_custom_call.1']
    %10 = vsyncpa [#allocation4], 0
    // Predicated region
    $region2: #{tpu_custom_call.1} parent=1 // pred_check
      _
    $region3: #{tpu_custom_call.1} parent=1 // pred_check_branch
      %12 = sbr.rel (0) target = $region5
    $region4: #{tpu_custom_call.1} parent=1 // pred_region
      _
    $region5: #{tpu_custom_call.1} parent=1 // pred_fallthru
      _
    // Predicated region
    $region6: #{tpu_custom_call.1} parent=1 // pred_check
      _
    $region7: #{tpu_custom_call.1} parent=1 // pred_check_branch
      %14 = sbr.rel (0) target = $region9
    $region8: #{tpu_custom_call.1} parent=1 // pred_region
      %s16 = ssub.s32 128, 128
      %17 = vsyncadd [#allocation4], %s16
      %s19 = sshll.u32 [#allocation3], 4
      %s20 = int_to_ptr.vmem [resolvable:$true] %s19
      %22 = dma.hbm_to_vmem [thread:$0]  %s1, 128, %s20, [#allocation4]
    $region9: #{tpu_custom_call.1} parent=1 // pred_fallthru
      _
    // Predicated region
    $region10: #{tpu_custom_call.1} parent=1 // pred_check
      _
    $region11: #{tpu_custom_call.1} parent=1 // pred_check_branch
      %24 = sbr.rel (0) target = $region13
    $region12: #{tpu_custom_call.1} parent=1 // pred_region
      _
    $region13: #{tpu_custom_call.1} parent=1 // pred_fallthru
      _
    // Predicated region
    $region14: #{tpu_custom_call.1} parent=1 // pred_check
      _
    $region15: #{tpu_custom_call.1} parent=1 // pred_check_branch
      %26 = sbr.rel (0) target = $region17
    $region16: #{tpu_custom_call.1} parent=1 // pred_region
      %27 = dma.done [#allocation4], 128
    $region17: #{tpu_custom_call.1} parent=1 // pred_fallthru
      _
    %p28 = scmp.eq.s32.totalorder 0, 0
    // Predicated region
    $region18: #{tpu_custom_call.1} parent=1 // pred_check
      %p29 = pneg %p28
    $region19: #{tpu_custom_call.1} parent=1 // pred_check_branch
      %31 = sbr.rel (%p29) target = $region21
    $region20: #{tpu_custom_call.1} parent=1 // pred_region
      %vm32 = vcmask 7168
      %33 = vst.msk [vmem:[#allocation2] sm:$0xff] %vm32, 0.0
    $region21: #{tpu_custom_call.1} parent=1 // pred_fallthru
      _
    %v34 = vld [vmem:[%s0] sm:$0xff]
    %v35 = vld [vmem:[#allocation3] sm:$0xff]
    %v36 = vsub.f32 %v34, %v35
    %v37 = vadd.f32 %v36, 1e-06
    %v38 = vld [vmem:[#allocation2] sm:$0xff]
    %v39 = vmul.f32 %v37, %v37
    %vm40 = vcmask 261120
    %v41 = vsel %vm40, %v39, 0.0
    %42 = vadd.xlane.f32.xlu0 %v41
    %v43 = vpop.xlane.xlu0 %42
    %v44 = vadd.f32 %v38, %v43
    %vm45 = vcmask 7168
    %46 = vst.msk [vmem:[#allocation2] sm:$0xff] %vm45, %v44
    // Predicated region
    $region22: #{tpu_custom_call.1} parent=1 // pred_check
      %p47 = pneg %p28
    $region23: #{tpu_custom_call.1} parent=1 // pred_check_branch
      %49 = sbr.rel (%p47) target = $region25
    $region24: #{tpu_custom_call.1} parent=1 // pred_region
      %v50 = vld [vmem:[#allocation2] sm:$0xff]
      %v51 = vrsqrt.pop %v50
      %v52 = vmul.f32 %v50, %v51
      %vm53 = vcmp.eq.f32.partialorder %v50, inf
      %v54 = vsel %vm53, %v50, %v52
      %vm55 = vcmp.eq.f32.partialorder %v50, 0.0
      %v56 = vand.u32 %v50, 2147483648
      %v57 = vsel %vm55, %v56, %v54
      %v58 = vsub.f32 2.0, %v57
      %v59 = vmax.f32 %v58, 0.0
      %60 = vst.msk [vmem:[%s3] sm:$0xff] %vm45, %v50
      %v61 = vld [vmem:[%s2] sm:$0xff]
      %v62 = vmul.f32 %v61, %v59
      %v63 = vmul.f32 %v62, %v59
      %64 = vst.msk [vmem:[%s4] sm:$0xff] %vm45, %v63
    $region25: #{tpu_custom_call.1} parent=1 // pred_fallthru
      _
    // Predicated region
    $region26: #{tpu_custom_call.1} parent=1 // pred_check
      _
    $region27: #{tpu_custom_call.1} parent=1 // pred_check_branch
      %66 = sbr.rel (0) target = $region29
    $region28: #{tpu_custom_call.1} parent=1 // pred_region
      _
    $region29: #{tpu_custom_call.1} parent=1 // pred_fallthru
      _
    // Predicated region
    $region30: #{tpu_custom_call.1} parent=1 // pred_check
      _
    $region31: #{tpu_custom_call.1} parent=1 // pred_check_branch
      %68 = sbr.rel (0) target = $region33
    $region32: #{tpu_custom_call.1} parent=1 // pred_region
      _
    $region33: #{tpu_custom_call.1} parent=1 // pred_fallthru
      _
    // Predicated region
    $region34: #{tpu_custom_call.1} parent=1 // pred_check
      _
    $region35: #{tpu_custom_call.1} parent=1 // pred_check_branch
      %70 = sbr.rel (0) target = $region37
    $region36: #{tpu_custom_call.1} parent=1 // pred_region
      _
    $region37: #{tpu_custom_call.1} parent=1 // pred_fallthru
      _
    // Predicated region
    $region38: #{tpu_custom_call.1} parent=1 // pred_check
      _
    $region39: #{tpu_custom_call.1} parent=1 // pred_check_branch
      %72 = sbr.rel (0) target = $region41
    $region40: #{tpu_custom_call.1} parent=1 // pred_region
      _
    $region41: #{tpu_custom_call.1} parent=1 // pred_fallthru
      _
    %73 = vsyncpa [#allocation4], 1

</llo_original>
